<compile_context>
chip_gen: v7x
topology: tpu7x:2x2x1
jax: 0.10.0
libtpu: 0.0.40
codegen_flags: <defaults>
</compile_context>

<pallas_src>
import math

import jax
import jax.numpy as jnp
from jax.experimental import pallas as pl
from jax.experimental.pallas import tpu as pltpu


def _channel_rate_kernel(rate_ref, x_ref, o_ref):
    # rate_ref: (TR, 1) per-row rates; x_ref / o_ref: (TR, TS) activation tile.
    # True divide (parity with the PyTorch module); broadcast along lanes.
    o_ref[...] = (x_ref[...] / rate_ref[...]).astype(o_ref.dtype)


def _pick_tile(total: int, quantum: int, cap_elems: int) -> int:
    """Block size along one axis, never exceeding cap_elems (unless full-extent fits).

    Legal Pallas block dims are multiples of the hardware quantum (8/16/32
    sublanes, 128 lanes) or the full array extent.  Preference:
      (a) the full extent when it fits under cap_elems (no ragged block),
      (b) the largest divisor of `total` near the cap that is a multiple of
          `quantum` (no ragged block),
      (c) a fixed multiple-of-quantum tile with a pl.cdiv grid; Pallas masks
          the ragged last block.
    """
    if total <= cap_elems:
        return total
    cap = max(quantum, (cap_elems // quantum) * quantum)
    d = cap
    while d >= max(quantum, cap // 2):
        if total % d == 0:
            return d
        d -= quantum
    return cap


def channel_rate(x: jax.Array, rates: jax.Array) -> jax.Array:
    """y = x / rates.reshape(-1, 1, 1): per-channel scaling, channel at axis -3."""
    assert x.ndim >= 3, "ChannelRate expects (..., C, H, W)-shaped input"
    orig_shape = x.shape
    ch_axis = x.ndim - 3
    C = x.shape[ch_axis]
    assert rates.shape == (C,)
    N = math.prod(x.shape[:ch_axis])
    S = math.prod(x.shape[ch_axis + 1:])
    R = N * C

    # Lane-dense layout: leading/channel dims fused onto the sublane axis,
    # spatial dims flattened onto the lane axis.  Pure metadata reshape.
    x2 = x.reshape(R, S)

    comp_dtype = x.dtype if jnp.issubdtype(x.dtype, jnp.floating) else jnp.float32
    # TODO(synk): integer inputs would be computed as float division and cast
    # back, which does not match integer-division semantics (module is float-only).
    rates_col = jnp.tile(rates.astype(comp_dtype), N).reshape(R, 1)

    itemsize = jnp.dtype(x.dtype).itemsize
    sub_q = max(8, 32 // itemsize)        # sublane quantum: 8 f32, 16 bf16, 32 int8
    target_block_bytes = 4 << 20          # ~4 MiB x/o blocks -> ~85% of HBM roofline

    # Lane tile: leave room for at least `sub_q` rows inside the block budget.
    ts = _pick_tile(S, 128, max(128, target_block_bytes // (sub_q * itemsize)))
    # Row tile: fill the remaining budget.
    tr = _pick_tile(R, sub_q, max(sub_q, target_block_bytes // (ts * itemsize)))

    grid = (pl.cdiv(R, tr), pl.cdiv(S, ts))

    # Double-buffered in + out blocks + rates column + slack, capped for v7x.
    block_bytes = tr * ts * itemsize
    rate_bytes = tr * jnp.dtype(comp_dtype).itemsize
    vmem_limit = min(32 << 20,
                     max(16 << 20, 4 * block_bytes + 4 * rate_bytes + (4 << 20)))

    y2 = pl.pallas_call(
        _channel_rate_kernel,
        out_shape=jax.ShapeDtypeStruct((R, S), x.dtype),
        grid=grid,
        in_specs=[
            pl.BlockSpec((tr, 1), lambda rb, sb: (rb, 0)),    # per-row rates
            pl.BlockSpec((tr, ts), lambda rb, sb: (rb, sb)),  # activation slab
        ],
        out_specs=pl.BlockSpec((tr, ts), lambda rb, sb: (rb, sb)),
        compiler_params=pltpu.CompilerParams(
            dimension_semantics=("parallel", "parallel"),
            vmem_limit_bytes=vmem_limit,
        ),
    )(rates_col, x2)

    return y2.reshape(orig_shape)


if __name__ == "__main__":
    # Small shapes consistent with the module: batch=2, channels=4, spatial=16.
    N, C, H, W = 2, 4, 16, 16

    key = jax.random.PRNGKey(0)
    x = jax.random.normal(key, (N, C, H, W), dtype=jnp.float32)

    # Parameter init: nn.Parameter(torch.ones(num_channels)) -> ones(C).
    # Deterministic non-trivial perturbation so the scaling is exercised.
    rates = jnp.ones((C,), dtype=jnp.float32) + 0.1 * jnp.arange(C, dtype=jnp.float32)

    y = jax.block_until_ready(channel_rate(x, rates))

    # Reference (plain JAX) check of the PyTorch semantics (true divide).
    y_ref = x / rates.reshape(-1, 1, 1)
    assert y.shape == x.shape and y.dtype == x.dtype
    assert jnp.allclose(y, y_ref, rtol=1e-5, atol=1e-6), "mismatch vs reference"

    print("KERNEL_OK")
</pallas_src>

<mosaic_0001>
module attributes {stable_mosaic.version = 11 : i64} {
  func.func @_channel_rate_kernel(%arg0: i32, %arg1: i32, %arg2: memref<8x1xf32, #tpu.memory_space<vmem>>, %arg3: memref<8x256xf32, #tpu.memory_space<vmem>>, %arg4: memref<8x256xf32, #tpu.memory_space<vmem>>) attributes {dimension_semantics = [#tpu.dimension_semantics<parallel>, #tpu.dimension_semantics<parallel>], iteration_bounds = array<i64: 1, 1>, scalar_prefetch = 0 : i64, scratch_operands = 0 : i64, tpu.core_type = #tpu.core_type<tc>, window_params = [{transform_indices = @transform_0, window_bounds = array<i64: 8, 1>}, {transform_indices = @transform_1, window_bounds = array<i64: 8, 256>}, {transform_indices = @transform_2, window_bounds = array<i64: 8, 256>}]} {
    %c0 = arith.constant 0 : index
    %c0_0 = arith.constant 0 : index
    %0 = vector.load %arg3[%c0, %c0_0] : memref<8x256xf32, #tpu.memory_space<vmem>>, vector<8x256xf32>
    %c0_1 = arith.constant 0 : index
    %c0_2 = arith.constant 0 : index
    %1 = vector.load %arg2[%c0_1, %c0_2] : memref<8x1xf32, #tpu.memory_space<vmem>>, vector<8x1xf32>
    %2 = vector.broadcast %1 : vector<8x1xf32> to vector<8x256xf32>
    %3 = arith.divf %0, %2 : vector<8x256xf32>
    %c0_3 = arith.constant 0 : index
    %c0_4 = arith.constant 0 : index
    %4 = vector.load %arg4[%c0_3, %c0_4] : memref<8x256xf32, #tpu.memory_space<vmem>>, vector<8x256xf32>
    tpu.vector_store %arg4[%c0_3, %c0_4], %3 {strides = array<i32>} : memref<8x256xf32, #tpu.memory_space<vmem>>, vector<8x256xf32>,
    return
  }
  func.func @transform_0(%arg0: i32, %arg1: i32) -> (i32, i32) {
    %c0_i32 = arith.constant 0 : i32
    %c0_i32_0 = arith.constant 0 : i32
    return %arg0, %c0_i32 : i32, i32
  }
  func.func @transform_1(%arg0: i32, %arg1: i32) -> (i32, i32) {
    %c0_i32 = arith.constant 0 : i32
    return %arg0, %arg1 : i32, i32
  }
  func.func @transform_2(%arg0: i32, %arg1: i32) -> (i32, i32) {
    %c0_i32 = arith.constant 0 : i32
    return %arg0, %arg1 : i32, i32
  }
}

</mosaic_0001>

<llo_original>
// kernel: tpu_custom_call.1
$region0: #{tpu_custom_call.1}
  #allocation0 [shape = 'u32[]', space=smem, size = 0x4, offset = 0x4, fixed_abs, tag = 'smem constant byte address 0x4 - core index']
  #allocation1 [shape = 'u32[144,128]{1,0:T(1,128)}', space=vmem, size = 0x12000, scoped, tag = 'internal scratch']
  %s0 = inlined_call_operand.vmem [shape: f32[8,1], index: 0, kind: input, shape index: {}]
  %s1 = inlined_call_operand.hbm [shape: f32[8,256], index: 1, kind: input, shape index: {}]
  %s2 = inlined_call_operand.hbm [shape: f32[8,256], index: 2, kind: output, shape index: {}]
  %s3 = sld [smem:[#allocation0]]
  $region22: #{tpu_custom_call.1} parent=0
    _
  %s5 = ssub.s32 1, %s3
  %s6 = scalar_select 0, %s5, %s3
  $region1: #{tpu_custom_call.1} parent=0
    #allocation2 [shape = 'u8[8192]{0}', space=vmem, size = 0x2000, scoped, tag = 'input window, operand 1, single buffered']
    #allocation3 [shape = 's32[1]{0}', space=sflag, size = 0x4, scoped, tag = 'scoped memory for tpu_custom_call.1']
    #allocation4 [shape = 's32[1]{0}', space=sflag, size = 0x4, scoped, tag = 'scoped memory for tpu_custom_call.1']
    #allocation5 [shape = 'u8[8192]{0}', space=vmem, size = 0x2000, scoped, tag = 'output window, operand 0, single buffered']
    %7 = vsyncpa [#allocation3], 0
    %8 = vsyncpa [#allocation4], 0
    // Predicated region
    $region2: #{tpu_custom_call.1} parent=1 // pred_check
      _
    $region3: #{tpu_custom_call.1} parent=1 // pred_check_branch
      %10 = sbr.rel (0) target = $region5
    $region4: #{tpu_custom_call.1} parent=1 // pred_region
      _
    $region5: #{tpu_custom_call.1} parent=1 // pred_fallthru
      _
    // Predicated region
    $region6: #{tpu_custom_call.1} parent=1 // pred_check
      _
    $region7: #{tpu_custom_call.1} parent=1 // pred_check_branch
      %12 = sbr.rel (0) target = $region9
    $region8: #{tpu_custom_call.1} parent=1 // pred_region
      %s14 = ssub.s32 256, 256
      %15 = vsyncadd [#allocation3], %s14
      %s17 = sshll.u32 [#allocation2], 4
      %s18 = int_to_ptr.vmem [resolvable:$true] %s17
      %20 = dma.hbm_to_vmem [thread:$0]  %s1, 256, %s18, [#allocation3]
    $region9: #{tpu_custom_call.1} parent=1 // pred_fallthru
      _
    // Predicated region
    $region10: #{tpu_custom_call.1} parent=1 // pred_check
      _
    $region11: #{tpu_custom_call.1} parent=1 // pred_check_branch
      %22 = sbr.rel (0) target = $region13
    $region12: #{tpu_custom_call.1} parent=1 // pred_region
      %23 = dma.done [#allocation3], 256
    $region13: #{tpu_custom_call.1} parent=1 // pred_fallthru
      _
    %v24 = vld [vmem:[#allocation2] sm:$0xff]
    %v25 = vld [vmem:[#allocation2 + $0x8] sm:$0xff]
    %v26 = vld [vmem:[%s0] sm:$0xff]
    %28 = vset.pattern.permute.xlu0 0
    %29 = vperm.xlu0 %28, %v26
    %v30 = vpop.permute.xlu0 %29
    %v32 = vrcp.pop %v30
    %v33 = vmul.f32 %v24, %v32
    %v34 = vmul.f32 %v25, %v32
    %35 = vst [vmem:[#allocation5] sm:$0xff] %v33
    %36 = vst [vmem:[#allocation5 + $0x8] sm:$0xff] %v34
    // Predicated region
    $region14: #{tpu_custom_call.1} parent=1 // pred_check
      _
    $region15: #{tpu_custom_call.1} parent=1 // pred_check_branch
      %38 = sbr.rel (0) target = $region17
    $region16: #{tpu_custom_call.1} parent=1 // pred_region
      %s40 = ssub.s32 256, 256
      %41 = vsyncadd [#allocation4], %s40
      %s43 = sshll.u32 [#allocation5], 4
      %s44 = int_to_ptr.vmem [resolvable:$true] %s43
      %46 = dma.vmem_to_hbm [thread:$0]  %s44, 256, %s2, [#allocation4]
    $region17: #{tpu_custom_call.1} parent=1 // pred_fallthru
      _
    // Predicated region
    $region18: #{tpu_custom_call.1} parent=1 // pred_check
      _
    $region19: #{tpu_custom_call.1} parent=1 // pred_check_branch
      %48 = sbr.rel (0) target = $region21
    $region20: #{tpu_custom_call.1} parent=1 // pred_region
      %49 = dma.done [#allocation4], 256
    $region21: #{tpu_custom_call.1} parent=1 // pred_fallthru
      _
    %50 = vsyncpa [#allocation3], 1
    %51 = vsyncpa [#allocation4], 1

</llo_original>
